<compile_context>
chip_gen: v7x
topology: tpu7x:2x2x1
jax: 0.10.0
libtpu: 0.0.40
codegen_flags: <defaults>
</compile_context>

<pallas_src>
import jax
import jax.numpy as jnp
from jax.experimental import pallas as pl
from jax.experimental.pallas import tpu as pltpu


def _hbm_copy_kernel(x_hbm, o_hbm, sem):
    # Full-array HBM -> HBM DMA.  No VMEM staging, no vld/vst, no per-step
    # pipeline overhead; the DMA engine moves the bytes at HBM bandwidth.
    cp = pltpu.make_async_copy(x_hbm, o_hbm, sem)
    cp.start()
    cp.wait()


def _identity_copy(x):
    """Bit-exact copy of `x` via a single HBM->HBM DMA inside Pallas."""
    nbytes = x.size * x.dtype.itemsize
    return pl.pallas_call(
        _hbm_copy_kernel,
        out_shape=jax.ShapeDtypeStruct(x.shape, x.dtype),
        in_specs=[pl.BlockSpec(memory_space=pl.ANY)],
        out_specs=pl.BlockSpec(memory_space=pl.ANY),
        scratch_shapes=[pltpu.SemaphoreType.DMA],
        compiler_params=pltpu.CompilerParams(has_side_effects=True),
        cost_estimate=pl.CostEstimate(
            flops=0, transcendentals=0, bytes_accessed=2 * nbytes),
    )(x)


def lambda_preprocess(x):
    """Pallas equivalent of Lambda(lambda x: x.view(-1, 1, 28, 28))."""
    B, D = x.shape
    assert D == 28 * 28, "expected flat MNIST pixels per row"
    out = _identity_copy(x)
    # Glue: row-major reshape, identical semantics to torch .view(-1,1,28,28).
    # TODO(synk): in a real model, drop this kernel and keep the reshape
    # metadata-only (or fuse it into the first downstream compute kernel).
    return out.reshape(-1, 1, 28, 28)


class Lambda:
    """Generic Lambda module: forward(x) = func(x)."""

    def __init__(self, func):
        self.func = func

    def __call__(self, x):
        return self.func(x)


if __name__ == "__main__":
    key = jax.random.PRNGKey(0)
    k1, k2 = jax.random.split(key)

    preprocess = Lambda(lambda_preprocess)

    # Case 1: typical batch (B % 8 == 0).
    x8 = jax.random.normal(k1, (8, 28 * 28), dtype=jnp.float32)
    y8 = preprocess(x8)
    jax.block_until_ready(y8)
    assert y8.shape == (8, 1, 28, 28) and y8.dtype == x8.dtype
    assert jnp.array_equal(y8, x8.reshape(-1, 1, 28, 28))

    # Case 2: odd tiny batch -- same dense DMA path (no masked fallback).
    x2 = jax.random.normal(k2, (2, 28 * 28), dtype=jnp.float32)
    y2 = preprocess(x2)
    jax.block_until_ready(y2)
    assert y2.shape == (2, 1, 28, 28) and y2.dtype == x2.dtype
    assert jnp.array_equal(y2, x2.reshape(-1, 1, 28, 28))

    print("KERNEL_OK")
</pallas_src>

<mosaic_0001>
module attributes {stable_mosaic.version = 11 : i64} {
  func.func @_hbm_copy_kernel(%arg0: memref<8x784xf32, #tpu.memory_space<any>>, %arg1: memref<8x784xf32, #tpu.memory_space<any>>, %arg2: memref<!tpu.dma_semaphore, #tpu.memory_space<semaphore_mem>>) attributes {dimension_semantics = [], scalar_prefetch = 0 : i64, scratch_operands = 1 : i64, tpu.core_type = #tpu.core_type<tc>} {
    tpu.enqueue_dma source(%arg0 : memref<8x784xf32, #tpu.memory_space<any>>) target(%arg1 : memref<8x784xf32, #tpu.memory_space<any>>) target_semaphore(%arg2 : memref<!tpu.dma_semaphore, #tpu.memory_space<semaphore_mem>>)
    tpu.wait_dma2 semaphore(%arg2 : memref<!tpu.dma_semaphore, #tpu.memory_space<semaphore_mem>>) src(%arg0 : memref<8x784xf32, #tpu.memory_space<any>>) dst(%arg1 : memref<8x784xf32, #tpu.memory_space<any>>)
    return
  }
}

</mosaic_0001>

<llo_original>
// kernel: tpu_custom_call.1
$region0: #{tpu_custom_call.1}
  #allocation0 [shape = 'u32[]', space=smem, size = 0x4, offset = 0x4, fixed_abs, tag = 'smem constant byte address 0x4 - core index']
  #allocation1 [shape = 'u32[144,128]{1,0:T(1,128)}', space=vmem, size = 0x12000, scoped, tag = 'internal scratch']
  #allocation2 [shape = 's32[1]{0}', space=sflag, size = 0x4, scoped, tag = 'scratch operand']
  #allocation3 [shape = 's32[]', space=sflag, size = 0x4, offset = 0, fixed_abs, tag = 'sflag constant byte address 0x0 - dummy sync flag']
  #allocation4 [shape = 'u32[0]{0}', space=smem, size = 0, offset = 0, fixed_abs, tag = 'smem constant byte address 0x0 - null']
  %s0 = inlined_call_operand.hbm [shape: f32[8,784], index: 0, kind: input, shape index: {}]
  %s1 = inlined_call_operand.hbm [shape: f32[8,784], index: 1, kind: output, shape index: {}]
  %s2 = sld [smem:[#allocation0]]
  $region2: #{tpu_custom_call.1} parent=0
    _
  %s4 = ssub.s32 1, %s2
  %s5 = scalar_select 0, %s4, %s2
  %s7 = sshll.u32 1, 14
  %s8 = sxor.u32 4294967295, %s7
  %s11 = sshll.u32 3, 24
  %s12 = sxor.u32 4294967295, %s11
  %s13 = sand.u32 0, %s12
  %s15 = sor.u32 %s13, 0
  %18 = dma.general %s0, 896, %s1, [#allocation2], [#allocation3], [#allocation4], %s15, 0
  %s19 = smul.u32 8, 1
  %s20 = smul.u32 %s19, 7
  %s21 = sshll.u32 %s20, 4
  %22 = dma.done [#allocation2], %s21
  %23 = vsyncmov [#allocation2]
  %s24 = vpop.sfrf %23
  %p25 = scmp.eq.s32.totalorder %s24, 0
  %p26 = pneg %p25
  %28 = shalt.err (%p26)

</llo_original>
